<compile_context>
chip_gen: v6e
topology: v6e:2x2x1
jax: 0.10.0
libtpu: 0.0.40
codegen_flags: <defaults>
</compile_context>

<pallas_src>
import jax
import jax.numpy as jnp
from jax.experimental import pallas as pl
from jax.experimental.pallas import tpu as pltpu


def estimation_kernel(x_ref, w1t_ref, b1_ref, w2t_ref, b2_ref, o_ref):
    # Batch lives on the LANE axis throughout the kernel.
    x = x_ref[...]                      # [TB, latent_dim]  (natural HBM layout)
    w1t = w1t_ref[...]                  # [hidden, latent_dim]

    # es1: Linear(latent_dim, 10) + Tanh, produced directly as h^T [hidden, TB].
    # dot_general contracts the lane dim of BOTH operands (q @ k^T pattern), so
    # no transpose of x / of the result is needed; f32 accumulation on the MXU.
    ht = jax.lax.dot_general(
        w1t, x,
        dimension_numbers=(((1,), (1,)), ((), ())),
        preferred_element_type=jnp.float32)           # [hidden, TB]
    ht = jnp.tanh(ht + b1_ref[...])                   # + [hidden, 1]; lane-dense EUP

    # es2: Dropout(p=0.5) -- eval mode => identity.
    # TODO(synk): training-mode dropout (pltpu.prng_seed + prng_random_bits
    #             Bernoulli mask with 1/(1-p) scaling) is not implemented.

    # es3: Linear(10, n_gmm) as one tiny MXU matmul: [n_gmm,10] @ [10,TB].
    logits = jnp.dot(w2t_ref[...], ht,
                     preferred_element_type=jnp.float32) + b2_ref[...]  # [n_gmm, TB]

    # es4: Softmax over the n_gmm rows (sublane axis): tiny per-column
    # reductions, lane-dense exp on the EUP, approximate reciprocal on the EUP
    # slot (row sums deviate from 1 by ~1e-4; swap to an exact divide if strict
    # normalization is required).
    m = jnp.max(logits, axis=0, keepdims=True)        # [1, TB]
    e = jnp.exp(logits - m)                           # [n_gmm, TB]
    denom = jnp.sum(e, axis=0, keepdims=True)         # [1, TB]
    o_ref[...] = (e * pl.reciprocal(denom, approx=True)).astype(o_ref.dtype)


def estimation_forward(x, w1, b1, w2, b2, *, block_batch=16384, core_parallel=False):
    """softmax(tanh(x @ w1 + b1) @ w2 + b2, axis=1) via a batch-tiled Pallas kernel.

    x:  [B, latent_dim] (f32 or bf16)   w1: [latent_dim, 10]   b1: [10]
    w2: [10, n_gmm]                     b2: [n_gmm]
    Returns [B, n_gmm] probabilities.  The kernel writes a lane-dense
    [n_gmm, B] array; the wrapper transposes that tiny result back to the
    PyTorch convention (n_gmm*B elements, negligible next to the x read).
    """
    B, latent_dim = x.shape
    hidden = w1.shape[1]
    n_gmm = w2.shape[1]

    # Tiny transposed weights / column biases (VMEM-resident, constant index maps).
    w1t = jnp.transpose(w1).astype(x.dtype)          # [hidden, latent_dim]
    w2t = jnp.transpose(w2).astype(jnp.float32)      # [n_gmm, hidden]
    b1c = jnp.reshape(b1, (hidden, 1)).astype(jnp.float32)
    b2c = jnp.reshape(b2, (n_gmm, 1)).astype(jnp.float32)

    # Batch tile = lane axis of the output block => multiple of 128 (or the full
    # batch for a single block).  No wrapper-side padding: Pallas handles the
    # ragged last block.  Keep >=2 grid steps when the batch allows (v7x dual TC).
    # VMEM @ TB=16384 f32: x 2 MiB x2 buffers + out 0.5 MiB x2 + ~3-4 MiB of
    # lane-dense temporaries ~= 8-9 MiB < v5e's 16 MiB scoped default.
    if B <= 2 * 128:
        TB = B                                        # single block == full array
    else:
        TB = min(max(128, (block_batch // 128) * 128),
                 max(128, ((B // 2) // 128) * 128))
    grid = (pl.cdiv(B, TB),)

    cost = pl.CostEstimate(
        flops=2 * B * (latent_dim * hidden + hidden * n_gmm),
        transcendentals=B * (hidden + n_gmm),
        bytes_accessed=(B * latent_dim * x.dtype.itemsize
                        + B * n_gmm * x.dtype.itemsize
                        + (latent_dim * hidden + hidden + hidden * n_gmm + n_gmm) * 4),
    )

    # "parallel" is the portability-safe default; pltpu.CORE_PARALLEL actually
    # shards the batch grid across v7x's two TensorCores (bandwidth-bound kernel
    # => up to ~2x there).
    sem = (pltpu.CORE_PARALLEL,) if core_parallel else ("parallel",)

    out_t = pl.pallas_call(
        estimation_kernel,
        out_shape=jax.ShapeDtypeStruct((n_gmm, B), x.dtype),
        grid=grid,
        in_specs=[
            pl.BlockSpec((TB, latent_dim), lambda i: (i, 0)),      # x: batch-tiled
            pl.BlockSpec((hidden, latent_dim), lambda i: (0, 0)),  # w1^T
            pl.BlockSpec((hidden, 1), lambda i: (0, 0)),           # b1 column
            pl.BlockSpec((n_gmm, hidden), lambda i: (0, 0)),       # w2^T
            pl.BlockSpec((n_gmm, 1), lambda i: (0, 0)),            # b2 column
        ],
        out_specs=pl.BlockSpec((n_gmm, TB), lambda i: (0, i)),     # lane-dense store
        compiler_params=pltpu.CompilerParams(dimension_semantics=sem),
        cost_estimate=cost,
    )(x, w1t, b1c, w2t, b2c)

    return jnp.transpose(out_t)                                    # [B, n_gmm]


def init_params(key, latent_dim, n_gmm):
    """Deterministic PyTorch-Linear-style init, stored as [in, out] so forward is x @ W."""
    k1, k2, k3, k4 = jax.random.split(key, 4)
    bound1 = 1.0 / jnp.sqrt(jnp.float32(latent_dim))
    bound2 = 1.0 / jnp.sqrt(jnp.float32(10.0))
    w1 = jax.random.uniform(k1, (latent_dim, 10), jnp.float32, -bound1, bound1)
    b1 = jax.random.uniform(k2, (10,), jnp.float32, -bound1, bound1)
    w2 = jax.random.uniform(k3, (10, n_gmm), jnp.float32, -bound2, bound2)
    b2 = jax.random.uniform(k4, (n_gmm,), jnp.float32, -bound2, bound2)
    return w1, b1, w2, b2


def reference_forward(x, w1, b1, w2, b2):
    h = jnp.tanh(x @ w1 + b1)
    logits = h @ w2 + b2
    return jax.nn.softmax(logits, axis=1)


if __name__ == "__main__":
    latent_dim, n_gmm = 32, 2
    batch = 300   # not a multiple of the 128-row tile -> exercises the ragged last block

    key = jax.random.PRNGKey(0)
    kx, kp = jax.random.split(key)
    x = jax.random.normal(kx, (batch, latent_dim), jnp.float32)
    w1, b1, w2, b2 = init_params(kp, latent_dim, n_gmm)

    ref = reference_forward(x, w1, b1, w2, b2)

    # Multi-block path: TB=128 -> grid=(3,), ragged last block (44 valid rows, no pad).
    out_tiled = jax.block_until_ready(
        estimation_forward(x, w1, b1, w2, b2, block_batch=128))

    # Single-block path (block dims == full array dims; batch not 128-aligned).
    out_single = jax.block_until_ready(
        estimation_forward(x[:200], w1, b1, w2, b2))

    for out, r in ((out_tiled, ref), (out_single, ref[:200])):
        assert out.shape == r.shape
        # tolerance relaxed slightly because of the EUP approximate reciprocal
        assert jnp.allclose(out, r, atol=5e-3, rtol=5e-3)
        assert jnp.allclose(jnp.sum(out, axis=1),
                            jnp.ones((out.shape[0],)), atol=5e-3)

    # bf16 activations: halves the dominant HBM stream (cast is free on v6e/v7x).
    out_bf16 = jax.block_until_ready(
        estimation_forward(x.astype(jnp.bfloat16), w1, b1, w2, b2, block_batch=128))
    assert out_bf16.shape == (batch, n_gmm)
    assert jnp.allclose(jnp.sum(out_bf16.astype(jnp.float32), axis=1),
                        jnp.ones((batch,)), atol=2e-2)

    # Optional v7x dual-TensorCore sharding of the batch grid; skipped cleanly
    # if the local chip/compiler rejects CORE_PARALLEL.
    try:
        out_cp = jax.block_until_ready(
            estimation_forward(x, w1, b1, w2, b2, block_batch=128, core_parallel=True))
        assert jnp.allclose(out_cp, ref, atol=5e-3, rtol=5e-3)
    except Exception:
        pass

    print("KERNEL_OK")
</pallas_src>

<mosaic_0001>
module attributes {stable_mosaic.version = 11 : i64} {
  func.func @estimation_kernel(%arg0: i32, %arg1: memref<128x32xf32, #tpu.memory_space<vmem>>, %arg2: memref<10x32xf32, #tpu.memory_space<vmem>>, %arg3: memref<10x1xf32, #tpu.memory_space<vmem>>, %arg4: memref<2x10xf32, #tpu.memory_space<vmem>>, %arg5: memref<2x1xf32, #tpu.memory_space<vmem>>, %arg6: memref<2x128xf32, #tpu.memory_space<vmem>>) attributes {dimension_semantics = [#tpu.dimension_semantics<parallel>], iteration_bounds = array<i64: 3>, scalar_prefetch = 0 : i64, scratch_operands = 0 : i64, tpu.core_type = #tpu.core_type<tc>, window_params = [{transform_indices = @transform_0, window_bounds = array<i64: 128, 32>}, {pipeline_mode = #tpu.pipeline_mode<synchronous>, transform_indices = @transform_1, window_bounds = array<i64: 10, 32>}, {pipeline_mode = #tpu.pipeline_mode<synchronous>, transform_indices = @transform_2, window_bounds = array<i64: 10, 1>}, {pipeline_mode = #tpu.pipeline_mode<synchronous>, transform_indices = @transform_3, window_bounds = array<i64: 2, 10>}, {pipeline_mode = #tpu.pipeline_mode<synchronous>, transform_indices = @transform_4, window_bounds = array<i64: 2, 1>}, {transform_indices = @transform_5, window_bounds = array<i64: 2, 128>}]} {
    %c0 = arith.constant 0 : index
    %c0_0 = arith.constant 0 : index
    %0 = vector.load %arg1[%c0, %c0_0] : memref<128x32xf32, #tpu.memory_space<vmem>>, vector<128x32xf32>
    %c0_1 = arith.constant 0 : index
    %c0_2 = arith.constant 0 : index
    %1 = vector.load %arg2[%c0_1, %c0_2] : memref<10x32xf32, #tpu.memory_space<vmem>>, vector<10x32xf32>
    %cst = arith.constant dense<0.000000e+00> : vector<10x128xf32>
    %2 = tpu.matmul %1, %0, %cst {dimension_numbers = #tpu.dot_dimension_numbers<[1], [1], [0], [0], [0, 0, 1, 0], [], []>} : vector<10x32xf32>, vector<128x32xf32>, vector<10x128xf32> -> vector<10x128xf32>
    %c0_3 = arith.constant 0 : index
    %c0_4 = arith.constant 0 : index
    %3 = vector.load %arg3[%c0_3, %c0_4] : memref<10x1xf32, #tpu.memory_space<vmem>>, vector<10x1xf32>
    %4 = vector.broadcast %3 : vector<10x1xf32> to vector<10x128xf32>
    %5 = arith.addf %2, %4 : vector<10x128xf32>
    %6 = math.tanh %5 : vector<10x128xf32>
    %c0_5 = arith.constant 0 : index
    %c0_6 = arith.constant 0 : index
    %7 = vector.load %arg4[%c0_5, %c0_6] : memref<2x10xf32, #tpu.memory_space<vmem>>, vector<2x10xf32>
    %cst_7 = arith.constant dense<0.000000e+00> : vector<2x128xf32>
    %8 = tpu.matmul %7, %6, %cst_7 {dimension_numbers = #tpu.dot_dimension_numbers<[1], [0], [0], [1], [0, 0, 1, 1], [], []>} : vector<2x10xf32>, vector<10x128xf32>, vector<2x128xf32> -> vector<2x128xf32>
    %c0_8 = arith.constant 0 : index
    %c0_9 = arith.constant 0 : index
    %9 = vector.load %arg5[%c0_8, %c0_9] : memref<2x1xf32, #tpu.memory_space<vmem>>, vector<2x1xf32>
    %10 = vector.broadcast %9 : vector<2x1xf32> to vector<2x128xf32>
    %11 = arith.addf %8, %10 : vector<2x128xf32>
    %cst_10 = arith.constant dense<0xFF800000> : vector<128xf32>
    %12 = vector.multi_reduction <maximumf>, %11, %cst_10 [0] : vector<2x128xf32> to vector<128xf32>
    %13 = vector.shape_cast %12 : vector<128xf32> to vector<1x128xf32>
    %14 = vector.broadcast %13 : vector<1x128xf32> to vector<2x128xf32>
    %15 = arith.subf %11, %14 : vector<2x128xf32>
    %16 = math.exp %15 : vector<2x128xf32>
    %cst_11 = arith.constant dense<0.000000e+00> : vector<128xf32>
    %17 = vector.multi_reduction <add>, %16, %cst_11 [0] : vector<2x128xf32> to vector<128xf32>
    %18 = vector.shape_cast %17 : vector<128xf32> to vector<1x128xf32>
    %19 = tpu.reciprocal %18 {approx = true} : vector<1x128xf32> -> vector<1x128xf32>
    %20 = vector.broadcast %19 : vector<1x128xf32> to vector<2x128xf32>
    %21 = arith.mulf %16, %20 : vector<2x128xf32>
    %c0_12 = arith.constant 0 : index
    %c0_13 = arith.constant 0 : index
    %22 = vector.load %arg6[%c0_12, %c0_13] : memref<2x128xf32, #tpu.memory_space<vmem>>, vector<2x128xf32>
    tpu.vector_store %arg6[%c0_12, %c0_13], %21 {strides = array<i32>} : memref<2x128xf32, #tpu.memory_space<vmem>>, vector<2x128xf32>,
    return
  }
  func.func @transform_0(%arg0: i32) -> (i32, i32) {
    %c0_i32 = arith.constant 0 : i32
    %c0_i32_0 = arith.constant 0 : i32
    return %arg0, %c0_i32 : i32, i32
  }
  func.func @transform_1(%arg0: i32) -> (i32, i32) {
    %c0_i32 = arith.constant 0 : i32
    %c0_i32_0 = arith.constant 0 : i32
    %c0_i32_1 = arith.constant 0 : i32
    return %c0_i32, %c0_i32_0 : i32, i32
  }
  func.func @transform_2(%arg0: i32) -> (i32, i32) {
    %c0_i32 = arith.constant 0 : i32
    %c0_i32_0 = arith.constant 0 : i32
    %c0_i32_1 = arith.constant 0 : i32
    return %c0_i32, %c0_i32_0 : i32, i32
  }
  func.func @transform_3(%arg0: i32) -> (i32, i32) {
    %c0_i32 = arith.constant 0 : i32
    %c0_i32_0 = arith.constant 0 : i32
    %c0_i32_1 = arith.constant 0 : i32
    return %c0_i32, %c0_i32_0 : i32, i32
  }
  func.func @transform_4(%arg0: i32) -> (i32, i32) {
    %c0_i32 = arith.constant 0 : i32
    %c0_i32_0 = arith.constant 0 : i32
    %c0_i32_1 = arith.constant 0 : i32
    return %c0_i32, %c0_i32_0 : i32, i32
  }
  func.func @transform_5(%arg0: i32) -> (i32, i32) {
    %c0_i32 = arith.constant 0 : i32
    %c0_i32_0 = arith.constant 0 : i32
    return %c0_i32, %arg0 : i32, i32
  }
}

</mosaic_0001>

<llo_original>
// kernel: tpu_custom_call.1
$region0: #{tpu_custom_call.1}
  #allocation0 [shape = 'u32[]', space=smem, size = 0x4, offset = 0x4, fixed_abs, tag = 'smem constant byte address 0x4 - core index']
  #allocation1 [shape = 'u32[144,128]{1,0:T(1,128)}', space=vmem, size = 0x12000, scoped, tag = 'internal scratch']
  %s0 = inlined_call_operand.vmem [shape: f32[300,32], index: 0, kind: input, shape index: {}]
  %s1 = inlined_call_operand.vmem [shape: f32[10,32], index: 1, kind: input, shape index: {}]
  %s2 = inlined_call_operand.vmem [shape: f32[10,1], index: 2, kind: input, shape index: {}]
  %s3 = inlined_call_operand.vmem [shape: f32[2,10], index: 3, kind: input, shape index: {}]
  %s4 = inlined_call_operand.vmem [shape: f32[2,1], index: 4, kind: input, shape index: {}]
  %s5 = inlined_call_operand.hbm [shape: f32[2,300], index: 5, kind: output, shape index: {}]
  %s6 = sld [smem:[#allocation0]]
  $region53: #{tpu_custom_call.1} parent=0
    _
  %s8 = ssub.s32 1, %s6
  %s9 = scalar_select 0, %s8, %s6
  $region1: #{tpu_custom_call.1} parent=0
    #allocation2 [shape = 'u8[2048]{0}', space=vmem, size = 0x800, scoped, tag = 'output window, operand 0']
    #allocation3 [shape = 's32[2]{0}', space=sflag, size = 0x8, scoped, tag = 'scoped memory for tpu_custom_call.1']
    %10 = vsyncpa [#allocation3], 0
    %s11 = scalar_lea.sflag [#allocation3], 1
    %12 = vsyncpa %s11, 0
    loop: start=0, step=1, limit=5
    $region2: #{tpu_custom_call.1} parent=1 // loop_pre_header
      _
    $region3: #{tpu_custom_call.1} parent=1 // loop_header
      %s14 = sphi 0, %s18
      %p15 = scmp.ge.s32.totalorder %s14, 5
      %s24 = sphi 0, %s26
      %s27 = sphi 0, %s24
      %s28 = sphi 0, %s27
      %s44 = sphi 0, %s28
      %s48 = sphi 0, %s48
      %s50 = sphi 0, %s48
      %s51 = sphi 0, %s50
      %s65 = sphi 0, %s51
      %s69 = sphi 0, %s69
      %s71 = sphi 0, %s69
      %s72 = sphi 0, %s71
      %s86 = sphi 0, %s72
      %s90 = sphi 0, %s90
      %s92 = sphi 0, %s90
      %s93 = sphi 0, %s92
      %s107 = sphi 0, %s93
      %s111 = sphi 0, %s111
      %s113 = sphi 0, %s111
      %s114 = sphi 0, %s113
      %s128 = sphi 0, %s114
      %s134 = sphi 0, %s136
      %s137 = sphi 0, %s134
      %s138 = sphi 0, %s137
      %s154 = sphi 0, %s138
    $region4: #{tpu_custom_call.1} parent=1 // loop_header_branch
      %17 = sbr.rel (%p15) target = $region8
    $region5: #{tpu_custom_call.1} parent=1 // loop_body
      %s19 = ssub.s32 %s14, 1
      %s20 = ssub.s32 %s14, 2
      %s21 = sadd.s32 %s14, 1
      %s22 = ssub.s32 %s14, %s21
      %p23 = scmp.eq.s32.totalorder %s22, 0
      %s25 = sadd.s32 %s24, 1
      %s26 = scalar_select %p23, %s24, %s25
      %p29 = pneg %p23
      %p30 = scmp.eq.s32.totalorder %s14, 2
      %p31 = por %p29, %p30
      %p32 = scmp.ne.s32.totalorder %s24, %s27
      %p33 = scmp.eq.s32.totalorder %s14, 0
      %p34 = por %p32, %p33
      %p35 = scmp.ne.s32.totalorder %s24, %s27
      %p36 = scmp.eq.s32.totalorder %s19, 2
      %p37 = por %p35, %p36
      %p38 = scmp.ne.s32.totalorder %s27, %s28
      %p39 = scmp.eq.s32.totalorder %s19, 0
      %p40 = por %p38, %p39
      %p41 = scmp.ne.s32.totalorder %s27, %s28
      %p42 = scmp.eq.s32.totalorder %s20, 2
      %p43 = por %p41, %p42
      %p45 = scmp.ne.s32.totalorder %s28, %s44
      %p46 = scmp.eq.s32.totalorder %s20, 0
      %p47 = por %p45, %p46
      %s49 = sadd.s32 %s48, 1
      %p52 = scmp.eq.s32.totalorder %s14, 2
      %p53 = scmp.ne.s32.totalorder %s48, %s50
      %p54 = scmp.eq.s32.totalorder %s14, 0
      %p55 = por %p53, %p54
      %p56 = scmp.ne.s32.totalorder %s48, %s50
      %p57 = scmp.eq.s32.totalorder %s19, 2
      %p58 = por %p56, %p57
      %p59 = scmp.ne.s32.totalorder %s50, %s51
      %p60 = scmp.eq.s32.totalorder %s19, 0
      %p61 = por %p59, %p60
      %p62 = scmp.ne.s32.totalorder %s50, %s51
      %p63 = scmp.eq.s32.totalorder %s20, 2
      %p64 = por %p62, %p63
      %p66 = scmp.ne.s32.totalorder %s51, %s65
      %p67 = scmp.eq.s32.totalorder %s20, 0
      %p68 = por %p66, %p67
      %s70 = sadd.s32 %s69, 1
      %p73 = scmp.eq.s32.totalorder %s14, 2
      %p74 = scmp.ne.s32.totalorder %s69, %s71
      %p75 = scmp.eq.s32.totalorder %s14, 0
      %p76 = por %p74, %p75
      %p77 = scmp.ne.s32.totalorder %s69, %s71
      %p78 = scmp.eq.s32.totalorder %s19, 2
      %p79 = por %p77, %p78
      %p80 = scmp.ne.s32.totalorder %s71, %s72
      %p81 = scmp.eq.s32.totalorder %s19, 0
      %p82 = por %p80, %p81
      %p83 = scmp.ne.s32.totalorder %s71, %s72
      %p84 = scmp.eq.s32.totalorder %s20, 2
      %p85 = por %p83, %p84
      %p87 = scmp.ne.s32.totalorder %s72, %s86
      %p88 = scmp.eq.s32.totalorder %s20, 0
      %p89 = por %p87, %p88
      %s91 = sadd.s32 %s90, 1
      %p94 = scmp.eq.s32.totalorder %s14, 2
      %p95 = scmp.ne.s32.totalorder %s90, %s92
      %p96 = scmp.eq.s32.totalorder %s14, 0
      %p97 = por %p95, %p96
      %p98 = scmp.ne.s32.totalorder %s90, %s92
      %p99 = scmp.eq.s32.totalorder %s19, 2
      %p100 = por %p98, %p99
      %p101 = scmp.ne.s32.totalorder %s92, %s93
      %p102 = scmp.eq.s32.totalorder %s19, 0
      %p103 = por %p101, %p102
      %p104 = scmp.ne.s32.totalorder %s92, %s93
      %p105 = scmp.eq.s32.totalorder %s20, 2
      %p106 = por %p104, %p105
      %p108 = scmp.ne.s32.totalorder %s93, %s107
      %p109 = scmp.eq.s32.totalorder %s20, 0
      %p110 = por %p108, %p109
      %s112 = sadd.s32 %s111, 1
      %p115 = scmp.eq.s32.totalorder %s14, 2
      %p116 = scmp.ne.s32.totalorder %s111, %s113
      %p117 = scmp.eq.s32.totalorder %s14, 0
      %p118 = por %p116, %p117
      %p119 = scmp.ne.s32.totalorder %s111, %s113
      %p120 = scmp.eq.s32.totalorder %s19, 2
      %p121 = por %p119, %p120
      %p122 = scmp.ne.s32.totalorder %s113, %s114
      %p123 = scmp.eq.s32.totalorder %s19, 0
      %p124 = por %p122, %p123
      %p125 = scmp.ne.s32.totalorder %s113, %s114
      %p126 = scmp.eq.s32.totalorder %s20, 2
      %p127 = por %p125, %p126
      %p129 = scmp.ne.s32.totalorder %s114, %s128
      %p130 = scmp.eq.s32.totalorder %s20, 0
      %p131 = por %p129, %p130
      %s132 = ssub.s32 %s14, %s21
      %p133 = scmp.eq.s32.totalorder %s132, 0
      %s135 = sadd.s32 %s134, 1
      %s136 = scalar_select %p133, %s134, %s135
      %p139 = pneg %p133
      %p140 = scmp.eq.s32.totalorder %s14, 2
      %p141 = por %p139, %p140
      %p142 = scmp.ne.s32.totalorder %s134, %s137
      %p143 = scmp.eq.s32.totalorder %s14, 0
      %p144 = por %p142, %p143
      %p145 = scmp.ne.s32.totalorder %s134, %s137
      %p146 = scmp.eq.s32.totalorder %s19, 2
      %p147 = por %p145, %p146
      %p148 = scmp.ne.s32.totalorder %s137, %s138
      %p149 = scmp.eq.s32.totalorder %s19, 0
      %p150 = por %p148, %p149
      %p151 = scmp.ne.s32.totalorder %s137, %s138
      %p152 = scmp.eq.s32.totalorder %s20, 2
      %p153 = por %p151, %p152
      %p155 = scmp.ne.s32.totalorder %s138, %s154
      %p156 = scmp.eq.s32.totalorder %s20, 0
      %p157 = por %p155, %p156
      %p158 = scmp.le.s32.totalorder 1, %s14
      %p159 = scmp.lt.s32.totalorder %s14, 4
      %p160 = pnand %p158, %p159
      %p161 = pneg %p160
      // Predicated region
      $region9: #{tpu_custom_call.1} parent=5 // pred_check
        _
      $region10: #{tpu_custom_call.1} parent=5 // pred_check_branch
        %163 = sbr.rel (%p160) target = $region12
      $region11: #{tpu_custom_call.1} parent=5 // pred_region
        %s164 = ssub.s32 %s14, 1
        // Predicated region
        $region13: #{tpu_custom_call.1} parent=11 // pred_check
          %p165 = pneg %p61
        $region14: #{tpu_custom_call.1} parent=11 // pred_check_branch
          %167 = sbr.rel (%p165) target = $region16
        $region15: #{tpu_custom_call.1} parent=11 // pred_region
          _
        $region16: #{tpu_custom_call.1} parent=11 // pred_fallthru
          _
        // Predicated region
        $region17: #{tpu_custom_call.1} parent=11 // pred_check
          %p168 = pneg %p82
        $region18: #{tpu_custom_call.1} parent=11 // pred_check_branch
          %170 = sbr.rel (%p168) target = $region20
        $region19: #{tpu_custom_call.1} parent=11 // pred_region
          _
        $region20: #{tpu_custom_call.1} parent=11 // pred_fallthru
          _
        // Predicated region
        $region21: #{tpu_custom_call.1} parent=11 // pred_check
          %p171 = pneg %p103
        $region22: #{tpu_custom_call.1} parent=11 // pred_check_branch
          %173 = sbr.rel (%p171) target = $region24
        $region23: #{tpu_custom_call.1} parent=11 // pred_region
          _
        $region24: #{tpu_custom_call.1} parent=11 // pred_fallthru
          _
        // Predicated region
        $region25: #{tpu_custom_call.1} parent=11 // pred_check
          %p174 = pneg %p124
        $region26: #{tpu_custom_call.1} parent=11 // pred_check_branch
          %176 = sbr.rel (%p174) target = $region28
        $region27: #{tpu_custom_call.1} parent=11 // pred_region
          _
        $region28: #{tpu_custom_call.1} parent=11 // pred_fallthru
          _
      $region12: #{tpu_custom_call.1} parent=5 // pred_fallthru
        _
      %p177 = scmp.lt.s32.totalorder %s14, 3
      // Predicated region
      $region29: #{tpu_custom_call.1} parent=5 // pred_check
        %p178 = pneg %p177
      $region30: #{tpu_custom_call.1} parent=5 // pred_check_branch
        %180 = sbr.rel (%p178) target = $region32
      $region31: #{tpu_custom_call.1} parent=5 // pred_region
        // Predicated region
        $region33: #{tpu_custom_call.1} parent=31 // pred_check
          %p181 = pneg %p34
        $region34: #{tpu_custom_call.1} parent=31 // pred_check_branch
          %183 = sbr.rel (%p181) target = $region36
        $region35: #{tpu_custom_call.1} parent=31 // pred_region
          %s184 = smul.u32 16, %s14
          %s185 = ssub.s32 38, %s184
          %p186 = scmp.lt.s32.totalorder %s185, 16
          %s187 = scalar_select %p186, %s185, 16
          %s188 = smul.u32 128, %s187
          %p189 = scmp.lt.s32.totalorder %s184, 37
          %s190 = scalar_select %p189, %s184, 37
          %s191 = smul.addr %s190, 8
          %s192 = scalar_lea.vmem %s0, %s191
          %s193 = smul.u32 16, %s14
          %s194 = ssub.s32 38, %s193
          %p195 = scmp.lt.s32.totalorder %s194, 16
          %s196 = scalar_select %p195, %s194, 16
          %s197 = smul.u32 128, %s196
        $region36: #{tpu_custom_call.1} parent=31 // pred_fallthru
          _
      $region32: #{tpu_custom_call.1} parent=5 // pred_fallthru
        _
      %p198 = scmp.le.s32.totalorder 1, %s14
      %p199 = scmp.lt.s32.totalorder %s14, 4
      %p200 = pnand %p198, %p199
      %p201 = pneg %p200
      // Predicated region
      $region37: #{tpu_custom_call.1} parent=5 // pred_check
        _
      $region38: #{tpu_custom_call.1} parent=5 // pred_check_branch
        %203 = sbr.rel (%p200) target = $region40
      $region39: #{tpu_custom_call.1} parent=5 // pred_region
        %s204 = ssub.s32 %s14, 1
        %s205 = smul.u32 16, %s19
        %s206 = ssub.s32 38, %s205
        %p207 = scmp.lt.s32.totalorder %s206, 16
        %s208 = scalar_select %p207, %s206, 16
        %s209 = smul.u32 128, %s208
        %p210 = scmp.lt.s32.totalorder %s205, 37
        %s211 = scalar_select %p210, %s205, 37
        %s212 = smul.addr %s211, 8
        %s213 = scalar_lea.vmem %s0, %s212
        %p214 = pneg %p40
        %p215 = pneg %p37
        %p216 = pneg %p61
        %p217 = pneg %p58
        %p218 = pneg %p82
        %p219 = pneg %p79
        %p220 = pneg %p103
        %p221 = pneg %p100
        %p222 = pneg %p124
        %p223 = pneg %p121
        %p224 = pneg %p150
        %p225 = pneg %p147
        %s226 = sand.u32 %s137, 1
        %s227 = scalar_lea.sflag [#allocation3], %s226
        %s228 = sand.u32 %s137, 1
        %s229 = smul.addr %s228, 2
        %s230 = scalar_lea.vmem [#allocation2], %s229
        %s231 = smul.u32 16, %s19
        %s232 = ssub.s32 38, %s231
        %p233 = scmp.lt.s32.totalorder %s232, 16
        %s234 = scalar_select %p233, %s232, 16
        %s235 = smul.u32 128, %s234
        %p236 = scmp.lt.s32.totalorder %s231, 37
        %s237 = scalar_select %p236, %s231, 37
        %s238 = smul.addr %s237, 8
        %s239 = scalar_lea.vmem %s0, %s238
        %s240 = smul.u32 16, %s19
        %s241 = ssub.s32 38, %s240
        %p242 = scmp.lt.s32.totalorder %s241, 16
        %s243 = scalar_select %p242, %s241, 16
        %s244 = smul.u32 128, %s243
        %v245 = vld [vmem:[%s239] sm:$0xff]
        %v246 = vld [vmem:[%s239 + $0x8] sm:$0xff]
        %v247 = vld [vmem:[%s239 + $0x10] sm:$0xff]
        %v248 = vld [vmem:[%s239 + $0x18] sm:$0xff]
        %v249 = vld [vmem:[%s239 + $0x20] sm:$0xff]
        %v250 = vld [vmem:[%s239 + $0x28] sm:$0xff]
        %v251 = vld [vmem:[%s239 + $0x30] sm:$0xff]
        %v252 = vld [vmem:[%s239 + $0x38] sm:$0xff]
        %v253 = vld [vmem:[%s239 + $0x40] sm:$0xff]
        %v254 = vld [vmem:[%s239 + $0x48] sm:$0xff]
        %v255 = vld [vmem:[%s239 + $0x50] sm:$0xff]
        %v256 = vld [vmem:[%s239 + $0x58] sm:$0xff]
        %v257 = vld [vmem:[%s239 + $0x60] sm:$0xff]
        %v258 = vld [vmem:[%s239 + $0x68] sm:$0xff]
        %v259 = vld [vmem:[%s239 + $0x70] sm:$0xff]
        %v260 = vld [vmem:[%s239 + $0x78] sm:$0xff]
        %v261 = vld [vmem:[%s1] sm:$0xff]
        %v262 = vld [vmem:[%s1 + $0x8] sm:$0x3]
        %v263 = vld [vmem:[%s2] sm:$0xff]
        %v264 = vld [vmem:[%s2 + $0x8] sm:$0x3]
        %266 = vset.pattern.permute.xlu0 0
        %267 = vperm.xlu0 %266, %v263
        %v268 = vpop.permute.xlu0 %267
        %271 = vset.pattern.permute.xlu0 0
        %272 = vperm.xlu0 %271, %v264
        %v273 = vpop.permute.xlu0 %272
        %vm275 = vcmask 261120
        %v277 = vsel %vm275, %v261, 0
        %v280 = vsel %vm275, %v262, 0
        %v283 = vsel %vm275, %v245, 0
        %v286 = vsel %vm275, %v246, 0
        %v289 = vsel %vm275, %v247, 0
        %v292 = vsel %vm275, %v248, 0
        %v295 = vsel %vm275, %v249, 0
        %v298 = vsel %vm275, %v250, 0
        %v301 = vsel %vm275, %v251, 0
        %v304 = vsel %vm275, %v252, 0
        %v307 = vsel %vm275, %v253, 0
        %v310 = vsel %vm275, %v254, 0
        %v313 = vsel %vm275, %v255, 0
        %v316 = vsel %vm275, %v256, 0
        %v319 = vsel %vm275, %v257, 0
        %v322 = vsel %vm275, %v258, 0
        %v325 = vsel %vm275, %v259, 0
        %v328 = vsel %vm275, %v260, 0
        %330 = vmatprep.subr.mxu0 0.0
        %331 = vmatpush1.xpose.msra.mxu0 %v328
        %332 = vmatprep.subr.mxu0 0.0
        %333 = vmatpush1.xpose.msra.mxu0 %v325
        %334 = vmatprep.subr.mxu0 0.0
        %335 = vmatpush1.xpose.msra.mxu0 %v322
        %336 = vmatprep.subr.mxu0 0.0
        %337 = vmatpush1.xpose.msra.mxu0 %v319
        %338 = vmatprep.subr.mxu0 0.0
        %339 = vmatpush1.xpose.msra.mxu0 %v316
        %340 = vmatprep.subr.mxu0 0.0
        %341 = vmatpush1.xpose.msra.mxu0 %v313
        %342 = vmatprep.subr.mxu0 0.0
        %343 = vmatpush1.xpose.msra.mxu0 %v310
        %344 = vmatprep.subr.mxu0 0.0
        %345 = vmatpush1.xpose.msra.mxu0 %v307
        %346 = vmatprep.subr.mxu0 0.0
        %347 = vmatpush1.xpose.msra.mxu0 %v304
        %348 = vmatprep.subr.mxu0 0.0
        %349 = vmatpush1.xpose.msra.mxu0 %v301
        %350 = vmatprep.subr.mxu0 0.0
        %351 = vmatpush1.xpose.msra.mxu0 %v298
        %352 = vmatprep.subr.mxu0 0.0
        %353 = vmatpush1.xpose.msra.mxu0 %v295
        %354 = vmatprep.subr.mxu0 0.0
        %355 = vmatpush1.xpose.msra.mxu0 %v292
        %356 = vmatprep.subr.mxu0 0.0
        %357 = vmatpush1.xpose.msra.mxu0 %v289
        %358 = vmatprep.subr.mxu0 0.0
        %359 = vmatpush1.xpose.msra.mxu0 %v286
        %360 = vmatprep.subr.mxu0 0.0
        %361 = vmatpush1.xpose.msra.mxu0 %v283
        %362 = vmatprep.subr.mxu0 0.0
        %363 = vmatpush2.xpose.msra.mxu0 0.0
        %364 = vmatprep.subr.mxu0 0.0
        %365 = vmatpush2.xpose.msra.mxu0 0.0
        %366 = vmatprep.subr.mxu0 0.0
        %367 = vmatpush2.xpose.msra.mxu0 0.0
        %368 = vmatprep.subr.mxu0 0.0
        %369 = vmatpush2.xpose.msra.mxu0 0.0
        %370 = vmatprep.subr.mxu0 0.0
        %371 = vmatpush2.xpose.msra.mxu0 0.0
        %372 = vmatprep.subr.mxu0 0.0
        %373 = vmatpush2.xpose.msra.mxu0 0.0
        %374 = vmatprep.subr.mxu0 0.0
        %375 = vmatpush2.xpose.msra.mxu0 0.0
        %376 = vmatprep.subr.mxu0 0.0
        %377 = vmatpush2.xpose.msra.mxu0 0.0
        %378 = vmatprep.subr.mxu0 0.0
        %379 = vmatpush2.xpose.msra.mxu0 0.0
        %380 = vmatprep.subr.mxu0 0.0
        %381 = vmatpush2.xpose.msra.mxu0 0.0
        %382 = vmatprep.subr.mxu0 0.0
        %383 = vmatpush2.xpose.msra.mxu0 0.0
        %384 = vmatprep.subr.mxu0 0.0
        %385 = vmatpush2.xpose.msra.mxu0 0.0
        %386 = vmatprep.subr.mxu0 0.0
        %387 = vmatpush2.xpose.msra.mxu0 0.0
        %388 = vmatprep.subr.mxu0 0.0
        %389 = vmatpush2.xpose.msra.mxu0 0.0
        %390 = vmatprep.subr.mxu0 0.0
        %391 = vmatpush2.xpose.msra.mxu0 0.0
        %392 = vmatprep.subr.mxu0 0.0
        %393 = vmatpush2.xpose.msra.mxu0 0.0
        %394 = vmatprep.mubr.f32.mxu0 0.0
        %395 = vmatmul.mubr.f32.gmra.mxu0 %v277
        %v396 = vpop.f32.mrf.mxu0
        %v397 = vadd.f32 %v268, %v396
        %v398 = vpop.f32.mrf.mxu0
        %399 = vmatprep.mubr.f32.mxu0 0.0
        %400 = vmatmul.mubr.f32.gmra.mxu0 %v280
        %v401 = vpop.f32.mrf.mxu0
        %v402 = vadd.f32 %v273, %v401
        %v403 = vpop.f32.mrf.mxu0
        %404 = vdwg.mxu0
        %v405 = vtanh.pop %v397
        %v406 = vtanh.pop %v402
        %v407 = vld [vmem:[%s3] sm:$0x3]
        %v408 = vld [vmem:[%s4] sm:$0x3]
        %410 = vset.pattern.permute.xlu0 0
        %411 = vperm.xlu0 %410, %v408
        %v412 = vpop.permute.xlu0 %411
        %vm414 = vcmask 80896
        %v416 = vsel %vm414, %v407, 0
        %vm418 = vcmask 1041408
        %v420 = vsel %vm418, %v406, 0
        %422 = vmatprep.subr.mxu0 0.0
        %423 = vmatpush1.msra.mxu0 0.0
        %424 = vmatprep.subr.mxu0 0.0
        %425 = vmatpush1.msra.mxu0 0.0
        %426 = vmatprep.subr.mxu0 0.0
        %427 = vmatpush1.msra.mxu0 0.0
        %428 = vmatprep.subr.mxu0 0.0
        %429 = vmatpush1.msra.mxu0 0.0
        %430 = vmatprep.subr.mxu0 0.0
        %431 = vmatpush1.msra.mxu0 0.0
        %432 = vmatprep.subr.mxu0 0.0
        %433 = vmatpush1.msra.mxu0 0.0
        %434 = vmatprep.subr.mxu0 0.0
        %435 = vmatpush1.msra.mxu0 0.0
        %436 = vmatprep.subr.mxu0 0.0
        %437 = vmatpush1.msra.mxu0 0.0
        %438 = vmatprep.subr.mxu0 0.0
        %439 = vmatpush1.msra.mxu0 0.0
        %440 = vmatprep.subr.mxu0 0.0
        %441 = vmatpush1.msra.mxu0 0.0
        %442 = vmatprep.subr.mxu0 0.0
        %443 = vmatpush1.msra.mxu0 0.0
        %444 = vmatprep.subr.mxu0 0.0
        %445 = vmatpush1.msra.mxu0 0.0
        %446 = vmatprep.subr.mxu0 0.0
        %447 = vmatpush1.msra.mxu0 0.0
        %448 = vmatprep.subr.mxu0 0.0
        %449 = vmatpush1.msra.mxu0 0.0
        %450 = vmatprep.subr.mxu0 0.0
        %451 = vmatpush1.msra.mxu0 %v420
        %452 = vmatprep.subr.mxu0 0.0
        %453 = vmatpush1.msra.mxu0 %v405
        %454 = vmatprep.subr.mxu0 0.0
        %455 = vmatpush2.msra.mxu0 0.0
        %456 = vmatprep.subr.mxu0 0.0
        %457 = vmatpush2.msra.mxu0 0.0
        %458 = vmatprep.subr.mxu0 0.0
        %459 = vmatpush2.msra.mxu0 0.0
        %460 = vmatprep.subr.mxu0 0.0
        %461 = vmatpush2.msra.mxu0 0.0
        %462 = vmatprep.subr.mxu0 0.0
        %463 = vmatpush2.msra.mxu0 0.0
        %464 = vmatprep.subr.mxu0 0.0
        %465 = vmatpush2.msra.mxu0 0.0
        %466 = vmatprep.subr.mxu0 0.0
        %467 = vmatpush2.msra.mxu0 0.0
        %468 = vmatprep.subr.mxu0 0.0
        %469 = vmatpush2.msra.mxu0 0.0
        %470 = vmatprep.subr.mxu0 0.0
        %471 = vmatpush2.msra.mxu0 0.0
        %472 = vmatprep.subr.mxu0 0.0
        %473 = vmatpush2.msra.mxu0 0.0
        %474 = vmatprep.subr.mxu0 0.0
        %475 = vmatpush2.msra.mxu0 0.0
        %476 = vmatprep.subr.mxu0 0.0
        %477 = vmatpush2.msra.mxu0 0.0
        %478 = vmatprep.subr.mxu0 0.0
        %479 = vmatpush2.msra.mxu0 0.0
        %480 = vmatprep.subr.mxu0 0.0
        %481 = vmatpush2.msra.mxu0 0.0
        %482 = vmatprep.subr.mxu0 0.0
        %483 = vmatpush2.msra.mxu0 0.0
        %484 = vmatprep.subr.mxu0 0.0
        %485 = vmatpush2.msra.mxu0 0.0
        %486 = vmatprep.mubr.f32.mxu0 0.0
        %487 = vmatmul.mubr.f32.gmra.mxu0 %v416
        %v488 = vpop.f32.mrf.mxu0
        %v489 = vadd.f32 %v412, %v488
        %v490 = vpop.f32.mrf.mxu0
        %491 = vdwg.mxu0
        %v492 = vsel %vm418, %v489, -inf
        %v493 = vrot.slane %v492, 4
        %v494 = vmax.f32 %v492, %v493
        %v495 = vrot.slane %v494, 2
        %v496 = vmax.f32 %v494, %v495
        %v497 = vrot.slane %v496, 1
        %v498 = vmax.f32 %v496, %v497
        %v499 = vsub.f32 %v489, %v498
        %v500 = vmul.f32 %v499, 1.442695
        %v501 = vpow.pop %v500
        %v502 = vsel %vm418, %v501, 0.0
        %v503 = vrot.slane %v502, 4
        %v504 = vadd.f32 %v502, %v503
        %v505 = vrot.slane %v504, 2
        %v506 = vadd.f32 %v504, %v505
        %v507 = vrot.slane %v506, 1
        %v508 = vadd.f32 %v506, %v507
        %v509 = vrcp.pop %v508
        %v510 = vmul.f32 %v501, %v509
        %511 = vst [vmem:[%s230] sm:$0x3] %v510
        %s512 = sand.u32 %s137, 1
        %s513 = scalar_lea.sflag [#allocation3], %s512
        %s514 = sand.u32 %s137, 1
        %s515 = smul.addr %s514, 2
        %s516 = scalar_lea.vmem [#allocation2], %s515
        // Predicated region
        $region41: #{tpu_custom_call.1} parent=39 // pred_check
          %p517 = pneg %p147
        $region42: #{tpu_custom_call.1} parent=39 // pred_check_branch
          %519 = sbr.rel (%p517) target = $region44
        $region43: #{tpu_custom_call.1} parent=39 // pred_region
          %s521 = ssub.s32 32, 32
          %522 = vsyncadd %s513, %s521
          %s523 = smul.addr %s19, 32
          %s524 = scalar_lea.hbm %s5, %s523
          %s526 = sshll.u32 %s516, 4
          %s527 = int_to_ptr.vmem [resolvable:$true] %s526
          %529 = dma.vmem_to_hbm [thread:$0]  %s527, 32, %s524, %s513
        $region44: #{tpu_custom_call.1} parent=39 // pred_fallthru
          _
      $region40: #{tpu_custom_call.1} parent=5 // pred_fallthru
        _
      %p530 = scmp.le.s32.totalorder 2, %s14
      // Predicated region
      $region45: #{tpu_custom_call.1} parent=5 // pred_check
        %p531 = pneg %p530
      $region46: #{tpu_custom_call.1} parent=5 // pred_check_branch
        %533 = sbr.rel (%p531) target = $region48
      $region47: #{tpu_custom_call.1} parent=5 // pred_region
        %s534 = ssub.s32 %s14, 2
        // Predicated region
        $region49: #{tpu_custom_call.1} parent=47 // pred_check
          %p535 = pneg %p153
        $region50: #{tpu_custom_call.1} parent=47 // pred_check_branch
          %537 = sbr.rel (%p535) target = $region52
        $region51: #{tpu_custom_call.1} parent=47 // pred_region
          %s538 = sand.u32 %s138, 1
          %s539 = scalar_lea.sflag [#allocation3], %s538
          %s540 = sand.u32 %s138, 1
          %s541 = smul.addr %s540, 2
          %s542 = scalar_lea.vmem [#allocation2], %s541
          %543 = dma.done %s539, 32
        $region52: #{tpu_custom_call.1} parent=47 // pred_fallthru
          _
      $region48: #{tpu_custom_call.1} parent=5 // pred_fallthru
        _
    $region6: #{tpu_custom_call.1} parent=1 // loop_footer
      %s18 = sadd.s32 1, %s14
    $region7: #{tpu_custom_call.1} parent=1 // loop_footer_branch
      %13 = sbr.rel target = $region3
    $region8: #{tpu_custom_call.1} parent=1 // loop_exit
      _
    %544 = vsyncpa [#allocation3], 1
    %s545 = scalar_lea.sflag [#allocation3], 1
    %546 = vsyncpa %s545, 1

</llo_original>
